<compile_context>
chip_gen: v7x
topology: tpu7x:2x2x1
jax: 0.10.0
libtpu: 0.0.40
codegen_flags: <defaults>
</compile_context>

<pallas_src>
import functools
import math

import jax
import jax.numpy as jnp
from jax.experimental import pallas as pl
from jax.experimental.pallas import tpu as pltpu


# ------------------------------ helpers ------------------------------------ #

_VMEM_LIMIT = 48 * 1024 * 1024  # safe on v5e/v6e (128 MiB) and v7x (64 MiB) parts


def _cparams(sem):
    return pltpu.CompilerParams(dimension_semantics=sem,
                                vmem_limit_bytes=_VMEM_LIMIT)


def _pick_tile(dim, target, align):
    """Largest tile <= target that evenly divides `dim` and is a multiple of
    `align`; falls back to the full dim (always legal: equals the array dim)."""
    if dim <= target:
        return dim
    t = min(target, dim)
    t -= t % align
    while t >= align:
        if dim % t == 0:
            return t
        t -= align
    return dim


def _head_group(num_heads, dk):
    """Heads per attention grid step so hg*dk is lane-dense (multiple of 128)
    when possible; otherwise all heads (block = full D, always legal)."""
    if dk % 128 == 0:
        return 1
    for hg in range(1, num_heads + 1):
        if num_heads % hg == 0 and (hg * dk) % 128 == 0:
            return hg
    return num_heads


# -------------------------- fused Q/K/V projections ------------------------- #

def fused_projections(x2d, ws, bs):
    """n projections (e.g. Q,K,V) from a single read of x2d (bf16 in/out)."""
    n = len(ws)
    M, K = x2d.shape
    N = ws[0].shape[1]
    tm = _pick_tile(M, 512, 8)

    def kernel(x_ref, *refs):
        w_refs = refs[:n]
        b_refs = refs[n:2 * n]
        o_refs = refs[2 * n:]
        x = x_ref[...]
        for wr, br, orf in zip(w_refs, b_refs, o_refs):
            y = jnp.dot(x, wr[...], preferred_element_type=jnp.float32) + br[...]
            orf[...] = y.astype(orf.dtype)

    in_specs = [pl.BlockSpec((tm, K), lambda i: (i, 0))]
    in_specs += [pl.BlockSpec((K, N), lambda i: (0, 0)) for _ in range(n)]
    in_specs += [pl.BlockSpec((1, N), lambda i: (0, 0)) for _ in range(n)]
    out = pl.pallas_call(
        kernel,
        out_shape=tuple(jax.ShapeDtypeStruct((M, N), jnp.bfloat16) for _ in range(n)),
        grid=(M // tm,),
        in_specs=in_specs,
        out_specs=[pl.BlockSpec((tm, N), lambda i: (i, 0)) for _ in range(n)],
        compiler_params=_cparams(("parallel",)),
    )(x2d, *ws, *[b.reshape(1, N) for b in bs])
    return out


# ------------------------------- attention ---------------------------------- #

def _attn_group_kernel(*refs, scale, dk, hg, causal, has_mask):
    # q: [Sq, hg*dk], k/v: [Sk, hg*dk] bf16; optional mask block [Sq, Sk] (0 = masked).
    if has_mask:
        m_ref, q_ref, k_ref, v_ref, o_ref = refs
        mval = m_ref[...]
    else:
        q_ref, k_ref, v_ref, o_ref = refs
    q = q_ref[...]
    k = k_ref[...]
    v = v_ref[...]
    Sq, Sk = q.shape[0], k.shape[0]
    if causal:
        row = jax.lax.broadcasted_iota(jnp.int32, (Sq, Sk), 0)
        col = jax.lax.broadcasted_iota(jnp.int32, (Sq, Sk), 1)
        keep = row >= col
    for h in range(hg):
        qh = q[:, h * dk:(h + 1) * dk]
        kh = k[:, h * dk:(h + 1) * dk]
        vh = v[:, h * dk:(h + 1) * dk]
        s = jax.lax.dot_general(qh, kh, (((1,), (1,)), ((), ())),
                                preferred_element_type=jnp.float32) * scale
        if has_mask:
            s = jnp.where(mval == 0.0, -1e9, s)
        if causal:
            s = jnp.where(keep, s, -1e9)
        m = jnp.max(s, axis=-1, keepdims=True)
        p = jnp.exp(s - m)
        # Guard against fully-masked rows (l underflow -> NaN).
        l = jnp.maximum(jnp.sum(p, axis=-1, keepdims=True), 1e-30)
        pw = (p * pl.reciprocal(l, approx=True)).astype(vh.dtype)
        o = jnp.dot(pw, vh, preferred_element_type=jnp.float32)
        o_ref[:, h * dk:(h + 1) * dk] = o.astype(o_ref.dtype)


def _prepare_mask(mask, B, Sq, Sk):
    m = jnp.asarray(mask, jnp.float32)
    if m.ndim == 4:                          # [B, 1, Sq, Sk]
        m = m.reshape(m.shape[0], m.shape[2], m.shape[3])
    if m.ndim == 2:                          # [Sq, Sk]
        m = m.reshape(1, Sq, Sk)
    return jnp.broadcast_to(m, (B, Sq, Sk))


def attention(q2d, k2d, v2d, *, B, Sq, Sk, num_heads, mask, causal, scale):
    """q2d: [B*Sq, D], k2d/v2d: [B*Sk, D] (bf16). Returns [B*Sq, D] bf16."""
    D = q2d.shape[1]
    dk = D // num_heads
    hg = _head_group(num_heads, dk)
    cw = hg * dk
    G = D // cw

    q_spec = pl.BlockSpec((Sq, cw), lambda b, g: (b, g))
    kv_spec = pl.BlockSpec((Sk, cw), lambda b, g: (b, g))
    o_spec = pl.BlockSpec((Sq, cw), lambda b, g: (b, g))
    out_shape = jax.ShapeDtypeStruct((B * Sq, D), jnp.bfloat16)
    has_mask = mask is not None
    kernel = functools.partial(_attn_group_kernel, scale=scale, dk=dk, hg=hg,
                               causal=causal, has_mask=has_mask)
    cparams = _cparams(("parallel", "parallel"))

    if not has_mask:
        return pl.pallas_call(
            kernel, out_shape=out_shape, grid=(B, G),
            in_specs=[q_spec, kv_spec, kv_spec],
            out_specs=o_spec, compiler_params=cparams,
        )(q2d, k2d, v2d)

    m3 = _prepare_mask(mask, B, Sq, Sk)
    m_spec = pl.BlockSpec((None, Sq, Sk), lambda b, g: (b, 0, 0))
    return pl.pallas_call(
        kernel, out_shape=out_shape, grid=(B, G),
        in_specs=[m_spec, q_spec, kv_spec, kv_spec],
        out_specs=o_spec, compiler_params=cparams,
    )(m3, q2d, k2d, v2d)


# ------------------ fused projection/W2 + residual + LayerNorm -------------- #

def _linear_add_ln_kernel(x_ref, w_ref, b_ref, r_ref, g_ref, be_ref,
                          o_ref, acc_ref, *, eps):
    # o = LayerNorm(residual + x @ w + b); K-accumulated, LN fused on last k step.
    @pl.when(pl.program_id(1) == 0)
    def _():
        acc_ref[...] = jnp.zeros_like(acc_ref)

    acc_ref[...] += jnp.dot(x_ref[...], w_ref[...],
                            preferred_element_type=jnp.float32)

    @pl.when(pl.program_id(1) == pl.num_programs(1) - 1)
    def _():
        y = acc_ref[...] + b_ref[...] + r_ref[...].astype(jnp.float32)
        mean = jnp.mean(y, axis=-1, keepdims=True)
        var = jnp.mean(jnp.square(y - mean), axis=-1, keepdims=True)
        yn = (y - mean) * jax.lax.rsqrt(var + eps)
        o_ref[...] = (yn * g_ref[...] + be_ref[...]).astype(o_ref.dtype)


def linear_add_layernorm(x2d, w, b, res2d, gamma, beta, eps=1e-5):
    M, K = x2d.shape
    D = w.shape[1]
    tm = _pick_tile(M, 512, 8)
    tk = _pick_tile(K, 512, 128)
    return pl.pallas_call(
        functools.partial(_linear_add_ln_kernel, eps=eps),
        out_shape=jax.ShapeDtypeStruct((M, D), jnp.bfloat16),
        grid=(M // tm, K // tk),
        in_specs=[
            pl.BlockSpec((tm, tk), lambda i, k: (i, k)),
            pl.BlockSpec((tk, D), lambda i, k: (k, 0)),
            pl.BlockSpec((1, D), lambda i, k: (0, 0)),
            pl.BlockSpec((tm, D), lambda i, k: (i, 0)),
            pl.BlockSpec((1, D), lambda i, k: (0, 0)),
            pl.BlockSpec((1, D), lambda i, k: (0, 0)),
        ],
        out_specs=pl.BlockSpec((tm, D), lambda i, k: (i, 0)),
        scratch_shapes=[pltpu.VMEM((tm, D), jnp.float32)],
        compiler_params=_cparams(("parallel", "arbitrary")),
    )(x2d, w, b.reshape(1, D), res2d, gamma.reshape(1, D), beta.reshape(1, D))


# ------------------------------ fused FFN ----------------------------------- #

def _ffn_kernel(x_ref, w1_ref, b1_ref, w2_ref, b2_ref, g_ref, be_ref,
                o_ref, acc_ref, *, eps):
    # acc += relu(x @ w1_f + b1_f) @ w2_f ; residual + LN fused on last f step.
    @pl.when(pl.program_id(1) == 0)
    def _():
        acc_ref[...] = jnp.zeros_like(acc_ref)

    h = jnp.dot(x_ref[...], w1_ref[...],
                preferred_element_type=jnp.float32) + b1_ref[...]
    h = jnp.maximum(h, 0.0).astype(w2_ref.dtype)
    acc_ref[...] += jnp.dot(h, w2_ref[...], preferred_element_type=jnp.float32)

    @pl.when(pl.program_id(1) == pl.num_programs(1) - 1)
    def _():
        y = acc_ref[...] + b2_ref[...] + x_ref[...].astype(jnp.float32)
        mean = jnp.mean(y, axis=-1, keepdims=True)
        var = jnp.mean(jnp.square(y - mean), axis=-1, keepdims=True)
        yn = (y - mean) * jax.lax.rsqrt(var + eps)
        o_ref[...] = (yn * g_ref[...] + be_ref[...]).astype(o_ref.dtype)


def ffn_fused(x2d, w1, b1, w2, b2, gamma, beta, eps=1e-5):
    """LN(x + relu(x@w1+b1)@w2 + b2); [B*S, d_ff] hidden never leaves VMEM."""
    M, D = x2d.shape
    F = w1.shape[1]
    tm = _pick_tile(M, 512, 8)
    tf = _pick_tile(F, 512, 128)
    return pl.pallas_call(
        functools.partial(_ffn_kernel, eps=eps),
        out_shape=jax.ShapeDtypeStruct((M, D), jnp.bfloat16),
        grid=(M // tm, F // tf),
        in_specs=[
            pl.BlockSpec((tm, D), lambda i, f: (i, 0)),
            pl.BlockSpec((D, tf), lambda i, f: (0, f)),
            pl.BlockSpec((1, tf), lambda i, f: (0, f)),
            pl.BlockSpec((tf, D), lambda i, f: (f, 0)),
            pl.BlockSpec((1, D), lambda i, f: (0, 0)),
            pl.BlockSpec((1, D), lambda i, f: (0, 0)),
            pl.BlockSpec((1, D), lambda i, f: (0, 0)),
        ],
        out_specs=pl.BlockSpec((tm, D), lambda i, f: (i, 0)),
        scratch_shapes=[pltpu.VMEM((tm, D), jnp.float32)],
        compiler_params=_cparams(("parallel", "arbitrary")),
    )(x2d, w1, b1.reshape(1, F), w2, b2.reshape(1, D),
      gamma.reshape(1, D), beta.reshape(1, D))


# --------------------------- model composition ------------------------------ #

def multi_head_attention(xq, xkv, p, mask, causal, num_heads, ln_g, ln_b):
    """Returns LN(xq + MHA(xq, xkv) @ Wo) -- attention sublayer incl. residual+LN."""
    B, Sq, D = xq.shape
    Sk = xkv.shape[1]
    dk = D // num_heads
    xq2 = xq.reshape(-1, D)

    if xq is xkv:  # self-attention: one fused QKV kernel reads x once
        q, k, v = fused_projections(
            xq2, [p["wq"], p["wk"], p["wv"]], [p["bq"], p["bk"], p["bv"]])
    else:          # cross-attention: Q from decoder stream, fused K/V from encoder
        (q,) = fused_projections(xq2, [p["wq"]], [p["bq"]])
        xkv2 = xkv.reshape(-1, D)
        k, v = fused_projections(xkv2, [p["wk"], p["wv"]], [p["bk"], p["bv"]])

    # Transpose-free: attention consumes the [B*S, D] projections directly.
    o2 = attention(q, k, v, B=B, Sq=Sq, Sk=Sk, num_heads=num_heads,
                   mask=mask, causal=causal, scale=1.0 / math.sqrt(dk))

    out = linear_add_layernorm(o2, p["wo"], p["bo"], xq2, ln_g, ln_b)
    return out.reshape(B, Sq, D)


def feed_forward_block(x, p, ln_g, ln_b):
    B, S, D = x.shape
    x2 = x.reshape(-1, D)
    out = ffn_fused(x2, p["w1"], p["b1"], p["w2"], p["b2"], ln_g, ln_b)
    return out.reshape(B, S, D)


def encoder_layer(x, p, mask, num_heads):
    x = multi_head_attention(x, x, p["self_attn"], mask, False, num_heads,
                             p["ln1_g"], p["ln1_b"])
    x = feed_forward_block(x, p["ffn"], p["ln2_g"], p["ln2_b"])
    return x


def decoder_layer(x, enc, p, src_mask, tgt_mask, num_heads):
    causal_self = isinstance(tgt_mask, str) and tgt_mask == "causal"
    self_mask = None if causal_self else tgt_mask
    x = multi_head_attention(x, x, p["self_attn"], self_mask, causal_self,
                             num_heads, p["ln1_g"], p["ln1_b"])
    x = multi_head_attention(x, enc, p["cross_attn"], src_mask, False,
                             num_heads, p["ln2_g"], p["ln2_b"])
    x = feed_forward_block(x, p["ffn"], p["ln3_g"], p["ln3_b"])
    return x


def transformer_forward(params, src, tgt, src_mask=None, tgt_mask=None):
    num_heads = params["num_heads"]
    enc = src.astype(jnp.bfloat16)
    for lp in params["encoder"]:
        enc = encoder_layer(enc, lp, src_mask, num_heads)
    dec = tgt.astype(jnp.bfloat16)
    for lp in params["decoder"]:
        dec = decoder_layer(dec, enc, lp, src_mask, tgt_mask, num_heads)
    return dec.astype(jnp.float32)


# --------------------------- parameter creation ----------------------------- #

def _init_attn(key, d_model):
    ks = jax.random.split(key, 4)
    mk = lambda k: (0.02 * jax.random.normal(k, (d_model, d_model),
                                             jnp.float32)).astype(jnp.bfloat16)
    z = jnp.zeros((d_model,), jnp.float32)
    return {"wq": mk(ks[0]), "bq": z, "wk": mk(ks[1]), "bk": z,
            "wv": mk(ks[2]), "bv": z, "wo": mk(ks[3]), "bo": z}


def _init_ffn(key, d_model, d_ff):
    k1, k2 = jax.random.split(key)
    return {"w1": (0.02 * jax.random.normal(k1, (d_model, d_ff),
                                            jnp.float32)).astype(jnp.bfloat16),
            "b1": jnp.zeros((d_ff,), jnp.float32),
            "w2": (0.02 * jax.random.normal(k2, (d_ff, d_model),
                                            jnp.float32)).astype(jnp.bfloat16),
            "b2": jnp.zeros((d_model,), jnp.float32)}


def init_params(key, num_encoder_layers, num_decoder_layers, d_model, num_heads, d_ff):
    ones = jnp.ones((d_model,), jnp.float32)
    zeros = jnp.zeros((d_model,), jnp.float32)
    enc_layers, dec_layers = [], []
    for _ in range(num_encoder_layers):
        key, k1, k2 = jax.random.split(key, 3)
        enc_layers.append({"self_attn": _init_attn(k1, d_model),
                           "ffn": _init_ffn(k2, d_model, d_ff),
                           "ln1_g": ones, "ln1_b": zeros,
                           "ln2_g": ones, "ln2_b": zeros})
    for _ in range(num_decoder_layers):
        key, k1, k2, k3 = jax.random.split(key, 4)
        dec_layers.append({"self_attn": _init_attn(k1, d_model),
                           "cross_attn": _init_attn(k2, d_model),
                           "ffn": _init_ffn(k3, d_model, d_ff),
                           "ln1_g": ones, "ln1_b": zeros,
                           "ln2_g": ones, "ln2_b": zeros,
                           "ln3_g": ones, "ln3_b": zeros})
    return {"encoder": enc_layers, "decoder": dec_layers, "num_heads": num_heads}


# --------------------------------- main -------------------------------------- #

if __name__ == "__main__":
    # Small config consistent with the module (scaled down from d_model=512, h=8, d_ff=2048)
    num_encoder_layers = 2
    num_decoder_layers = 2
    d_model = 32
    num_heads = 4
    d_ff = 64
    batch = 2
    src_seq = 8
    tgt_seq = 8

    key = jax.random.PRNGKey(0)
    kp, ks, kt = jax.random.split(key, 3)
    params = init_params(kp, num_encoder_layers, num_decoder_layers,
                         d_model, num_heads, d_ff)

    src = jax.random.normal(ks, (batch, src_seq, d_model), jnp.float32)
    tgt = jax.random.normal(kt, (batch, tgt_seq, d_model), jnp.float32)

    # Causal decoder self-attention mask generated in-kernel (iota compare),
    # matching torch masked_fill(mask == 0, -1e9) semantics for a tril mask.
    out = transformer_forward(params, src, tgt, src_mask=None, tgt_mask="causal")
    out = jax.block_until_ready(out)

    assert out.shape == (batch, tgt_seq, d_model), out.shape
    assert bool(jnp.all(jnp.isfinite(out)))
    print("KERNEL_OK")
</pallas_src>

<mosaic_0001>
module attributes {stable_mosaic.version = 11 : i64} {
  func.func @kernel(%arg0: i32, %arg1: memref<16x32xbf16, #tpu.memory_space<vmem>>, %arg2: memref<32x32xbf16, #tpu.memory_space<vmem>>, %arg3: memref<32x32xbf16, #tpu.memory_space<vmem>>, %arg4: memref<32x32xbf16, #tpu.memory_space<vmem>>, %arg5: memref<1x32xf32, #tpu.memory_space<vmem>>, %arg6: memref<1x32xf32, #tpu.memory_space<vmem>>, %arg7: memref<1x32xf32, #tpu.memory_space<vmem>>, %arg8: memref<16x32xbf16, #tpu.memory_space<vmem>>, %arg9: memref<16x32xbf16, #tpu.memory_space<vmem>>, %arg10: memref<16x32xbf16, #tpu.memory_space<vmem>>) attributes {dimension_semantics = [#tpu.dimension_semantics<parallel>], iteration_bounds = array<i64: 1>, scalar_prefetch = 0 : i64, scratch_operands = 0 : i64, tpu.core_type = #tpu.core_type<tc>, window_params = [{transform_indices = @transform_0, window_bounds = array<i64: 16, 32>}, {pipeline_mode = #tpu.pipeline_mode<synchronous>, transform_indices = @transform_1, window_bounds = array<i64: 32, 32>}, {pipeline_mode = #tpu.pipeline_mode<synchronous>, transform_indices = @transform_2, window_bounds = array<i64: 32, 32>}, {pipeline_mode = #tpu.pipeline_mode<synchronous>, transform_indices = @transform_3, window_bounds = array<i64: 32, 32>}, {pipeline_mode = #tpu.pipeline_mode<synchronous>, transform_indices = @transform_4, window_bounds = array<i64: 1, 32>}, {pipeline_mode = #tpu.pipeline_mode<synchronous>, transform_indices = @transform_5, window_bounds = array<i64: 1, 32>}, {pipeline_mode = #tpu.pipeline_mode<synchronous>, transform_indices = @transform_6, window_bounds = array<i64: 1, 32>}, {transform_indices = @transform_7, window_bounds = array<i64: 16, 32>}, {transform_indices = @transform_8, window_bounds = array<i64: 16, 32>}, {transform_indices = @transform_9, window_bounds = array<i64: 16, 32>}]} {
    %c0 = arith.constant 0 : index
    %c0_0 = arith.constant 0 : index
    %0 = vector.load %arg1[%c0, %c0_0] : memref<16x32xbf16, #tpu.memory_space<vmem>>, vector<16x32xbf16>
    %c0_1 = arith.constant 0 : index
    %c0_2 = arith.constant 0 : index
    %1 = vector.load %arg2[%c0_1, %c0_2] : memref<32x32xbf16, #tpu.memory_space<vmem>>, vector<32x32xbf16>
    %cst = arith.constant dense<0.000000e+00> : vector<16x32xf32>
    %2 = tpu.matmul %0, %1, %cst {dimension_numbers = #tpu.dot_dimension_numbers<[1], [0], [0], [1], [0, 0, 1, 1], [], []>} : vector<16x32xbf16>, vector<32x32xbf16>, vector<16x32xf32> -> vector<16x32xf32>
    %c0_3 = arith.constant 0 : index
    %c0_4 = arith.constant 0 : index
    %3 = vector.load %arg5[%c0_3, %c0_4] : memref<1x32xf32, #tpu.memory_space<vmem>>, vector<1x32xf32>
    %4 = vector.broadcast %3 : vector<1x32xf32> to vector<16x32xf32>
    %5 = arith.addf %2, %4 : vector<16x32xf32>
    %6 = arith.truncf %5 : vector<16x32xf32> to vector<16x32xbf16>
    %c0_5 = arith.constant 0 : index
    %c0_6 = arith.constant 0 : index
    %7 = vector.load %arg8[%c0_5, %c0_6] : memref<16x32xbf16, #tpu.memory_space<vmem>>, vector<16x32xbf16>
    tpu.vector_store %arg8[%c0_5, %c0_6], %6 {strides = array<i32>} : memref<16x32xbf16, #tpu.memory_space<vmem>>, vector<16x32xbf16>,
    %c0_7 = arith.constant 0 : index
    %c0_8 = arith.constant 0 : index
    %8 = vector.load %arg3[%c0_7, %c0_8] : memref<32x32xbf16, #tpu.memory_space<vmem>>, vector<32x32xbf16>
    %cst_9 = arith.constant dense<0.000000e+00> : vector<16x32xf32>
    %9 = tpu.matmul %0, %8, %cst_9 {dimension_numbers = #tpu.dot_dimension_numbers<[1], [0], [0], [1], [0, 0, 1, 1], [], []>} : vector<16x32xbf16>, vector<32x32xbf16>, vector<16x32xf32> -> vector<16x32xf32>
    %c0_10 = arith.constant 0 : index
    %c0_11 = arith.constant 0 : index
    %10 = vector.load %arg6[%c0_10, %c0_11] : memref<1x32xf32, #tpu.memory_space<vmem>>, vector<1x32xf32>
    %11 = vector.broadcast %10 : vector<1x32xf32> to vector<16x32xf32>
    %12 = arith.addf %9, %11 : vector<16x32xf32>
    %13 = arith.truncf %12 : vector<16x32xf32> to vector<16x32xbf16>
    %c0_12 = arith.constant 0 : index
    %c0_13 = arith.constant 0 : index
    %14 = vector.load %arg9[%c0_12, %c0_13] : memref<16x32xbf16, #tpu.memory_space<vmem>>, vector<16x32xbf16>
    tpu.vector_store %arg9[%c0_12, %c0_13], %13 {strides = array<i32>} : memref<16x32xbf16, #tpu.memory_space<vmem>>, vector<16x32xbf16>,
    %c0_14 = arith.constant 0 : index
    %c0_15 = arith.constant 0 : index
    %15 = vector.load %arg4[%c0_14, %c0_15] : memref<32x32xbf16, #tpu.memory_space<vmem>>, vector<32x32xbf16>
    %cst_16 = arith.constant dense<0.000000e+00> : vector<16x32xf32>
    %16 = tpu.matmul %0, %15, %cst_16 {dimension_numbers = #tpu.dot_dimension_numbers<[1], [0], [0], [1], [0, 0, 1, 1], [], []>} : vector<16x32xbf16>, vector<32x32xbf16>, vector<16x32xf32> -> vector<16x32xf32>
    %c0_17 = arith.constant 0 : index
    %c0_18 = arith.constant 0 : index
    %17 = vector.load %arg7[%c0_17, %c0_18] : memref<1x32xf32, #tpu.memory_space<vmem>>, vector<1x32xf32>
    %18 = vector.broadcast %17 : vector<1x32xf32> to vector<16x32xf32>
    %19 = arith.addf %16, %18 : vector<16x32xf32>
    %20 = arith.truncf %19 : vector<16x32xf32> to vector<16x32xbf16>
    %c0_19 = arith.constant 0 : index
    %c0_20 = arith.constant 0 : index
    %21 = vector.load %arg10[%c0_19, %c0_20] : memref<16x32xbf16, #tpu.memory_space<vmem>>, vector<16x32xbf16>
    tpu.vector_store %arg10[%c0_19, %c0_20], %20 {strides = array<i32>} : memref<16x32xbf16, #tpu.memory_space<vmem>>, vector<16x32xbf16>,
    return
  }
  func.func @transform_0(%arg0: i32) -> (i32, i32) {
    %c0_i32 = arith.constant 0 : i32
    %c0_i32_0 = arith.constant 0 : i32
    return %arg0, %c0_i32 : i32, i32
  }
  func.func @transform_1(%arg0: i32) -> (i32, i32) {
    %c0_i32 = arith.constant 0 : i32
    %c0_i32_0 = arith.constant 0 : i32
    %c0_i32_1 = arith.constant 0 : i32
    return %c0_i32, %c0_i32_0 : i32, i32
  }
  func.func @transform_2(%arg0: i32) -> (i32, i32) {
    %c0_i32 = arith.constant 0 : i32
    %c0_i32_0 = arith.constant 0 : i32
    %c0_i32_1 = arith.constant 0 : i32
    return %c0_i32, %c0_i32_0 : i32, i32
  }
  func.func @transform_3(%arg0: i32) -> (i32, i32) {
    %c0_i32 = arith.constant 0 : i32
    %c0_i32_0 = arith.constant 0 : i32
    %c0_i32_1 = arith.constant 0 : i32
    return %c0_i32, %c0_i32_0 : i32, i32
  }
  func.func @transform_4(%arg0: i32) -> (i32, i32) {
    %c0_i32 = arith.constant 0 : i32
    %c0_i32_0 = arith.constant 0 : i32
    %c0_i32_1 = arith.constant 0 : i32
    return %c0_i32, %c0_i32_0 : i32, i32
  }
  func.func @transform_5(%arg0: i32) -> (i32, i32) {
    %c0_i32 = arith.constant 0 : i32
    %c0_i32_0 = arith.constant 0 : i32
    %c0_i32_1 = arith.constant 0 : i32
    return %c0_i32, %c0_i32_0 : i32, i32
  }
  func.func @transform_6(%arg0: i32) -> (i32, i32) {
    %c0_i32 = arith.constant 0 : i32
    %c0_i32_0 = arith.constant 0 : i32
    %c0_i32_1 = arith.constant 0 : i32
    return %c0_i32, %c0_i32_0 : i32, i32
  }
  func.func @transform_7(%arg0: i32) -> (i32, i32) {
    %c0_i32 = arith.constant 0 : i32
    %c0_i32_0 = arith.constant 0 : i32
    return %arg0, %c0_i32 : i32, i32
  }
  func.func @transform_8(%arg0: i32) -> (i32, i32) {
    %c0_i32 = arith.constant 0 : i32
    %c0_i32_0 = arith.constant 0 : i32
    return %arg0, %c0_i32 : i32, i32
  }
  func.func @transform_9(%arg0: i32) -> (i32, i32) {
    %c0_i32 = arith.constant 0 : i32
    %c0_i32_0 = arith.constant 0 : i32
    return %arg0, %c0_i32 : i32, i32
  }
}

</mosaic_0001>

<llo_original>
// kernel: tpu_custom_call.1
$region0: #{tpu_custom_call.1}
  #allocation0 [shape = 'u32[]', space=smem, size = 0x4, offset = 0x4, fixed_abs, tag = 'smem constant byte address 0x4 - core index']
  #allocation1 [shape = 'u32[144,128]{1,0:T(1,128)}', space=vmem, size = 0x12000, scoped, tag = 'internal scratch']
  %s0 = inlined_call_operand.hbm [shape: bf16[16,32], index: 0, kind: input, shape index: {}]
  %s1 = inlined_call_operand.hbm [shape: bf16[32,32], index: 1, kind: input, shape index: {}]
  %s2 = inlined_call_operand.hbm [shape: bf16[32,32], index: 2, kind: input, shape index: {}]
  %s3 = inlined_call_operand.hbm [shape: bf16[32,32], index: 3, kind: input, shape index: {}]
  %s4 = inlined_call_operand.vmem [shape: f32[1,32], index: 4, kind: input, shape index: {}]
  %s5 = inlined_call_operand.vmem [shape: f32[1,32], index: 5, kind: input, shape index: {}]
  %s6 = inlined_call_operand.vmem [shape: f32[1,32], index: 6, kind: input, shape index: {}]
  %s7 = inlined_call_operand.hbm [shape: bf16[16,32], index: 7, kind: output, shape index: {0}]
  %s8 = inlined_call_operand.hbm [shape: bf16[16,32], index: 8, kind: output, shape index: {1}]
  %s9 = inlined_call_operand.hbm [shape: bf16[16,32], index: 9, kind: output, shape index: {2}]
  %10 = xla_tuple %s7, %s8, %s9
  %s11 = sld [smem:[#allocation0]]
  $region70: #{tpu_custom_call.1} parent=0
    _
  %s13 = ssub.s32 1, %s11
  %s14 = scalar_select 0, %s13, %s11
  $region1: #{tpu_custom_call.1} parent=0
    #allocation2 [shape = 'u8[4096]{0}', space=vmem, size = 0x1000, scoped, tag = 'input window, operand 0, single buffered']
    #allocation3 [shape = 's32[1]{0}', space=sflag, size = 0x4, scoped, tag = 'scoped memory for tpu_custom_call.1']
    #allocation4 [shape = 's32[1]{0}', space=sflag, size = 0x4, scoped, tag = 'scoped memory for tpu_custom_call.1']
    #allocation5 [shape = 'u8[8192]{0}', space=vmem, size = 0x2000, scoped, tag = 'input window, operand 1, single buffered']
    #allocation6 [shape = 's32[1]{0}', space=sflag, size = 0x4, scoped, tag = 'scoped memory for tpu_custom_call.1']
    #allocation7 [shape = 'u8[8192]{0}', space=vmem, size = 0x2000, scoped, tag = 'input window, operand 2, single buffered']
    #allocation8 [shape = 'u8[8192]{0}', space=vmem, size = 0x2000, scoped, tag = 'input window, operand 3, single buffered']
    #allocation9 [shape = 's32[1]{0}', space=sflag, size = 0x4, scoped, tag = 'scoped memory for tpu_custom_call.1']
    #allocation10 [shape = 'u8[4096]{0}', space=vmem, size = 0x1000, scoped, tag = 'output window, operand 0, single buffered']
    #allocation11 [shape = 'u8[4096]{0}', space=vmem, size = 0x1000, scoped, tag = 'output window, operand 1, single buffered']
    #allocation12 [shape = 's32[1]{0}', space=sflag, size = 0x4, scoped, tag = 'scoped memory for tpu_custom_call.1']
    #allocation13 [shape = 'u8[4096]{0}', space=vmem, size = 0x1000, scoped, tag = 'output window, operand 2, single buffered']
    %15 = vsyncpa [#allocation3], 0
    %16 = vsyncpa [#allocation6], 0
    %17 = vsyncpa [#allocation9], 0
    %18 = vsyncpa [#allocation4], 0
    %19 = vsyncpa [#allocation12], 0
    // Predicated region
    $region2: #{tpu_custom_call.1} parent=1 // pred_check
      _
    $region3: #{tpu_custom_call.1} parent=1 // pred_check_branch
      %21 = sbr.rel (0) target = $region5
    $region4: #{tpu_custom_call.1} parent=1 // pred_region
      %s23 = ssub.s32 128, 128
      %24 = vsyncadd [#allocation3], %s23
      %s25 = sshll.u32 [#allocation2], 4
      %s26 = int_to_ptr.vmem [resolvable:$true] %s25
      %31 = dma.hbm_to_vmem [thread:$0]  %s0, 128, %s26, [#allocation3], 64, 64, 4
    $region5: #{tpu_custom_call.1} parent=1 // pred_fallthru
      _
    // Predicated region
    $region6: #{tpu_custom_call.1} parent=1 // pred_check
      _
    $region7: #{tpu_custom_call.1} parent=1 // pred_check_branch
      %33 = sbr.rel (0) target = $region9
    $region8: #{tpu_custom_call.1} parent=1 // pred_region
      %s35 = ssub.s32 256, 256
      %36 = vsyncadd [#allocation6], %s35
      %s37 = sshll.u32 [#allocation5], 4
      %s38 = int_to_ptr.vmem [resolvable:$true] %s37
      %43 = dma.hbm_to_vmem [thread:$0]  %s1, 256, %s38, [#allocation6], 64, 64, 4
    $region9: #{tpu_custom_call.1} parent=1 // pred_fallthru
      _
    // Predicated region
    $region10: #{tpu_custom_call.1} parent=1 // pred_check
      _
    $region11: #{tpu_custom_call.1} parent=1 // pred_check_branch
      %45 = sbr.rel (0) target = $region13
    $region12: #{tpu_custom_call.1} parent=1 // pred_region
      %s47 = ssub.s32 256, 256
      %48 = vsyncadd [#allocation6], %s47
      %s49 = sshll.u32 [#allocation7], 4
      %s50 = int_to_ptr.vmem [resolvable:$true] %s49
      %55 = dma.hbm_to_vmem [thread:$0]  %s2, 256, %s50, [#allocation6], 64, 64, 4
    $region13: #{tpu_custom_call.1} parent=1 // pred_fallthru
      _
    // Predicated region
    $region14: #{tpu_custom_call.1} parent=1 // pred_check
      _
    $region15: #{tpu_custom_call.1} parent=1 // pred_check_branch
      %57 = sbr.rel (0) target = $region17
    $region16: #{tpu_custom_call.1} parent=1 // pred_region
      %s59 = ssub.s32 256, 256
      %60 = vsyncadd [#allocation9], %s59
      %s61 = sshll.u32 [#allocation8], 4
      %s62 = int_to_ptr.vmem [resolvable:$true] %s61
      %67 = dma.hbm_to_vmem [thread:$0]  %s3, 256, %s62, [#allocation9], 64, 64, 4
    $region17: #{tpu_custom_call.1} parent=1 // pred_fallthru
      _
    // Predicated region
    $region18: #{tpu_custom_call.1} parent=1 // pred_check
      _
    $region19: #{tpu_custom_call.1} parent=1 // pred_check_branch
      %69 = sbr.rel (0) target = $region21
    $region20: #{tpu_custom_call.1} parent=1 // pred_region
      _
    $region21: #{tpu_custom_call.1} parent=1 // pred_fallthru
      _
    // Predicated region
    $region22: #{tpu_custom_call.1} parent=1 // pred_check
      _
    $region23: #{tpu_custom_call.1} parent=1 // pred_check_branch
      %71 = sbr.rel (0) target = $region25
    $region24: #{tpu_custom_call.1} parent=1 // pred_region
      _
    $region25: #{tpu_custom_call.1} parent=1 // pred_fallthru
      _
    // Predicated region
    $region26: #{tpu_custom_call.1} parent=1 // pred_check
      _
    $region27: #{tpu_custom_call.1} parent=1 // pred_check_branch
      %73 = sbr.rel (0) target = $region29
    $region28: #{tpu_custom_call.1} parent=1 // pred_region
      _
    $region29: #{tpu_custom_call.1} parent=1 // pred_fallthru
      _
    // Predicated region
    $region30: #{tpu_custom_call.1} parent=1 // pred_check
      _
    $region31: #{tpu_custom_call.1} parent=1 // pred_check_branch
      %75 = sbr.rel (0) target = $region33
    $region32: #{tpu_custom_call.1} parent=1 // pred_region
      %76 = dma.done [#allocation3], 128
    $region33: #{tpu_custom_call.1} parent=1 // pred_fallthru
      _
    // Predicated region
    $region34: #{tpu_custom_call.1} parent=1 // pred_check
      _
    $region35: #{tpu_custom_call.1} parent=1 // pred_check_branch
      %78 = sbr.rel (0) target = $region37
    $region36: #{tpu_custom_call.1} parent=1 // pred_region
      %79 = dma.done [#allocation6], 256
    $region37: #{tpu_custom_call.1} parent=1 // pred_fallthru
      _
    // Predicated region
    $region38: #{tpu_custom_call.1} parent=1 // pred_check
      _
    $region39: #{tpu_custom_call.1} parent=1 // pred_check_branch
      %81 = sbr.rel (0) target = $region41
    $region40: #{tpu_custom_call.1} parent=1 // pred_region
      %82 = dma.done [#allocation6], 256
    $region41: #{tpu_custom_call.1} parent=1 // pred_fallthru
      _
    // Predicated region
    $region42: #{tpu_custom_call.1} parent=1 // pred_check
      _
    $region43: #{tpu_custom_call.1} parent=1 // pred_check_branch
      %84 = sbr.rel (0) target = $region45
    $region44: #{tpu_custom_call.1} parent=1 // pred_region
      %85 = dma.done [#allocation9], 256
    $region45: #{tpu_custom_call.1} parent=1 // pred_fallthru
      _
    %v87 = vld [vmem:[#allocation2] sm:$0xf]
    %v88 = vld [vmem:[#allocation2 + $0x4] sm:$0xf]
    %v89 = vld [vmem:[#allocation5] sm:$0xf]
    %v90 = vld [vmem:[#allocation5 + $0x4] sm:$0xf]
    %v91 = vld [vmem:[#allocation5 + $0x8] sm:$0xf]
    %v92 = vld [vmem:[#allocation5 + $0xc] sm:$0xf]
    %v93 = vld [vmem:[%s4] sm:$0x1]
    %v95 = vlaneseq
    %v96 = vshrl.u32 %v95, 7
    %v97 = vsub.s32 0, %v96
    %v98 = vrot.slane %v93, %v97
    %v102 = vunpack.c.l.b16 %v87
    %v103 = vunpack.c.l.b16 %v88
    %v104 = vpack.c.b16 %v103, %v102
    %v109 = vunpack.c.l.b16 %v89
    %v110 = vunpack.c.l.b16 %v90
    %v111 = vunpack.c.l.b16 %v91
    %v112 = vunpack.c.l.b16 %v92
    %v113 = vpack.c.b16 %v110, %v109
    %v114 = vpack.c.b16 %v112, %v111
    %vm117 = vcmask 261120
    %v119 = vsel %vm117, %v104, 0
    %121 = vmatprep.subr.bf16.mxu0 0
    %122 = vmatpush1.bf16.msra.mxu0 %v113
    %123 = vmatprep.subr.bf16.mxu0 0
    %124 = vmatpush1.bf16.msra.mxu0 %v114
    %125 = vmatprep.subr.bf16.mxu0 0
    %126 = vmatpush1.bf16.msra.mxu0 0
    %127 = vmatprep.subr.bf16.mxu0 0
    %128 = vmatpush1.bf16.msra.mxu0 0
    %129 = vmatprep.subr.bf16.mxu0 0
    %130 = vmatpush1.bf16.msra.mxu0 0
    %131 = vmatprep.subr.bf16.mxu0 0
    %132 = vmatpush1.bf16.msra.mxu0 0
    %133 = vmatprep.subr.bf16.mxu0 0
    %134 = vmatpush1.bf16.msra.mxu0 0
    %135 = vmatprep.subr.bf16.mxu0 0
    %136 = vmatpush1.bf16.msra.mxu0 0
    %137 = vmatprep.subr.bf16.mxu0 0
    %138 = vmatpush1.bf16.msra.mxu0 0
    %139 = vmatprep.subr.bf16.mxu0 0
    %140 = vmatpush1.bf16.msra.mxu0 0
    %141 = vmatprep.subr.bf16.mxu0 0
    %142 = vmatpush1.bf16.msra.mxu0 0
    %143 = vmatprep.subr.bf16.mxu0 0
    %144 = vmatpush1.bf16.msra.mxu0 0
    %145 = vmatprep.subr.bf16.mxu0 0
    %146 = vmatpush1.bf16.msra.mxu0 0
    %147 = vmatprep.subr.bf16.mxu0 0
    %148 = vmatpush1.bf16.msra.mxu0 0
    %149 = vmatprep.subr.bf16.mxu0 0
    %150 = vmatpush1.bf16.msra.mxu0 0
    %151 = vmatprep.subr.bf16.mxu0 0
    %152 = vmatpush1.bf16.msra.mxu0 0
    %153 = vmatprep.mubr.bf16.mxu0 0
    %154 = vmatmul.mubr.bf16.gmra.mrb[0].mxu0 %v119
    %v155 = vpop.f32.mrb[0].mxu0
    %v156 = vadd.f32 %v98, %v155
    %v157 = vpop.f32.mrb[0].mxu0
    %v158 = vpop.f32.mrb[0].mxu0
    %v159 = vadd.f32 %v98, %v158
    %v160 = vpop.f32.mrb[0].mxu0
    %161 = vdwg.mxu0
    %v162 = vpack.c.bf16 %v159, %v156
    %v164 = vunpack.c.l.b16 %v162
    %v165 = vunpack.c.h.b16 %v162
    %v166 = vpack.c.b16 %v164, %v164
    %v167 = vpack.c.b16 %v165, %v165
    %vm170 = vcmask 257024
    %171 = vst.msk [vmem:[#allocation10] sm:$0xf] %vm170, %v166
    %172 = vst.msk [vmem:[#allocation10 + $0x4] sm:$0xf] %vm170, %v167
    %v173 = vld [vmem:[#allocation7] sm:$0xf]
    %v174 = vld [vmem:[#allocation7 + $0x4] sm:$0xf]
    %v175 = vld [vmem:[#allocation7 + $0x8] sm:$0xf]
    %v176 = vld [vmem:[#allocation7 + $0xc] sm:$0xf]
    %v177 = vld [vmem:[%s5] sm:$0x1]
    %v179 = vlaneseq
    %v180 = vshrl.u32 %v179, 7
    %v181 = vsub.s32 0, %v180
    %v182 = vrot.slane %v177, %v181
    %v188 = vunpack.c.l.b16 %v173
    %v189 = vunpack.c.l.b16 %v174
    %v190 = vunpack.c.l.b16 %v175
    %v191 = vunpack.c.l.b16 %v176
    %v192 = vpack.c.b16 %v189, %v188
    %v193 = vpack.c.b16 %v191, %v190
    %196 = vmatprep.subr.bf16.mxu0 0
    %197 = vmatpush1.bf16.msra.mxu0 %v192
    %198 = vmatprep.subr.bf16.mxu0 0
    %199 = vmatpush1.bf16.msra.mxu0 %v193
    %200 = vmatprep.subr.bf16.mxu0 0
    %201 = vmatpush1.bf16.msra.mxu0 0
    %202 = vmatprep.subr.bf16.mxu0 0
    %203 = vmatpush1.bf16.msra.mxu0 0
    %204 = vmatprep.subr.bf16.mxu0 0
    %205 = vmatpush1.bf16.msra.mxu0 0
    %206 = vmatprep.subr.bf16.mxu0 0
    %207 = vmatpush1.bf16.msra.mxu0 0
    %208 = vmatprep.subr.bf16.mxu0 0
    %209 = vmatpush1.bf16.msra.mxu0 0
    %210 = vmatprep.subr.bf16.mxu0 0
    %211 = vmatpush1.bf16.msra.mxu0 0
    %212 = vmatprep.subr.bf16.mxu0 0
    %213 = vmatpush1.bf16.msra.mxu0 0
    %214 = vmatprep.subr.bf16.mxu0 0
    %215 = vmatpush1.bf16.msra.mxu0 0
    %216 = vmatprep.subr.bf16.mxu0 0
    %217 = vmatpush1.bf16.msra.mxu0 0
    %218 = vmatprep.subr.bf16.mxu0 0
    %219 = vmatpush1.bf16.msra.mxu0 0
    %220 = vmatprep.subr.bf16.mxu0 0
    %221 = vmatpush1.bf16.msra.mxu0 0
    %222 = vmatprep.subr.bf16.mxu0 0
    %223 = vmatpush1.bf16.msra.mxu0 0
    %224 = vmatprep.subr.bf16.mxu0 0
    %225 = vmatpush1.bf16.msra.mxu0 0
    %226 = vmatprep.subr.bf16.mxu0 0
    %227 = vmatpush1.bf16.msra.mxu0 0
    %228 = vmatprep.mubr.bf16.mxu0 0
    %229 = vmatmul.mubr.bf16.gmra.mrb[0].mxu0 %v119
    %v230 = vpop.f32.mrb[0].mxu0
    %v231 = vadd.f32 %v182, %v230
    %v232 = vpop.f32.mrb[0].mxu0
    %v233 = vpop.f32.mrb[0].mxu0
    %v234 = vadd.f32 %v182, %v233
    %v235 = vpop.f32.mrb[0].mxu0
    %236 = vdwg.mxu0
    %v237 = vpack.c.bf16 %v234, %v231
    %v239 = vunpack.c.l.b16 %v237
    %v240 = vunpack.c.h.b16 %v237
    %v241 = vpack.c.b16 %v239, %v239
    %v242 = vpack.c.b16 %v240, %v240
    %245 = vst.msk [vmem:[#allocation11] sm:$0xf] %vm170, %v241
    %246 = vst.msk [vmem:[#allocation11 + $0x4] sm:$0xf] %vm170, %v242
    %v247 = vld [vmem:[#allocation8] sm:$0xf]
    %v248 = vld [vmem:[#allocation8 + $0x4] sm:$0xf]
    %v249 = vld [vmem:[#allocation8 + $0x8] sm:$0xf]
    %v250 = vld [vmem:[#allocation8 + $0xc] sm:$0xf]
    %v251 = vld [vmem:[%s6] sm:$0x1]
    %v253 = vlaneseq
    %v254 = vshrl.u32 %v253, 7
    %v255 = vsub.s32 0, %v254
    %v256 = vrot.slane %v251, %v255
    %v262 = vunpack.c.l.b16 %v247
    %v263 = vunpack.c.l.b16 %v248
    %v264 = vunpack.c.l.b16 %v249
    %v265 = vunpack.c.l.b16 %v250
    %v266 = vpack.c.b16 %v263, %v262
    %v267 = vpack.c.b16 %v265, %v264
    %270 = vmatprep.subr.bf16.mxu0 0
    %271 = vmatpush1.bf16.msra.mxu0 %v266
    %272 = vmatprep.subr.bf16.mxu0 0
    %273 = vmatpush1.bf16.msra.mxu0 %v267
    %274 = vmatprep.subr.bf16.mxu0 0
    %275 = vmatpush1.bf16.msra.mxu0 0
    %276 = vmatprep.subr.bf16.mxu0 0
    %277 = vmatpush1.bf16.msra.mxu0 0
    %278 = vmatprep.subr.bf16.mxu0 0
    %279 = vmatpush1.bf16.msra.mxu0 0
    %280 = vmatprep.subr.bf16.mxu0 0
    %281 = vmatpush1.bf16.msra.mxu0 0
    %282 = vmatprep.subr.bf16.mxu0 0
    %283 = vmatpush1.bf16.msra.mxu0 0
    %284 = vmatprep.subr.bf16.mxu0 0
    %285 = vmatpush1.bf16.msra.mxu0 0
    %286 = vmatprep.subr.bf16.mxu0 0
    %287 = vmatpush1.bf16.msra.mxu0 0
    %288 = vmatprep.subr.bf16.mxu0 0
    %289 = vmatpush1.bf16.msra.mxu0 0
    %290 = vmatprep.subr.bf16.mxu0 0
    %291 = vmatpush1.bf16.msra.mxu0 0
    %292 = vmatprep.subr.bf16.mxu0 0
    %293 = vmatpush1.bf16.msra.mxu0 0
    %294 = vmatprep.subr.bf16.mxu0 0
    %295 = vmatpush1.bf16.msra.mxu0 0
    %296 = vmatprep.subr.bf16.mxu0 0
    %297 = vmatpush1.bf16.msra.mxu0 0
    %298 = vmatprep.subr.bf16.mxu0 0
    %299 = vmatpush1.bf16.msra.mxu0 0
    %300 = vmatprep.subr.bf16.mxu0 0
    %301 = vmatpush1.bf16.msra.mxu0 0
    %302 = vmatprep.mubr.bf16.mxu0 0
    %303 = vmatmul.mubr.bf16.gmra.mrb[0].mxu0 %v119
    %v304 = vpop.f32.mrb[0].mxu0
    %v305 = vadd.f32 %v256, %v304
    %v306 = vpop.f32.mrb[0].mxu0
    %v307 = vpop.f32.mrb[0].mxu0
    %v308 = vadd.f32 %v256, %v307
    %v309 = vpop.f32.mrb[0].mxu0
    %310 = vdwg.mxu0
    %v311 = vpack.c.bf16 %v308, %v305
    %v313 = vunpack.c.l.b16 %v311
    %v314 = vunpack.c.h.b16 %v311
    %v315 = vpack.c.b16 %v313, %v313
    %v316 = vpack.c.b16 %v314, %v314
    %319 = vst.msk [vmem:[#allocation13] sm:$0xf] %vm170, %v315
    %320 = vst.msk [vmem:[#allocation13 + $0x4] sm:$0xf] %vm170, %v316
    // Predicated region
    $region46: #{tpu_custom_call.1} parent=1 // pred_check
      _
    $region47: #{tpu_custom_call.1} parent=1 // pred_check_branch
      %322 = sbr.rel (0) target = $region49
    $region48: #{tpu_custom_call.1} parent=1 // pred_region
      %s324 = ssub.s32 128, 128
      %325 = vsyncadd [#allocation4], %s324
      %s326 = sshll.u32 [#allocation10], 4
      %s327 = int_to_ptr.vmem [resolvable:$true] %s326
      %332 = dma.vmem_to_hbm [thread:$0]  %s327, 128, %s7, [#allocation4], 64, 64, 4
    $region49: #{tpu_custom_call.1} parent=1 // pred_fallthru
      _
    // Predicated region
    $region50: #{tpu_custom_call.1} parent=1 // pred_check
      _
    $region51: #{tpu_custom_call.1} parent=1 // pred_check_branch
      %334 = sbr.rel (0) target = $region53
    $region52: #{tpu_custom_call.1} parent=1 // pred_region
      %s336 = ssub.s32 128, 128
      %337 = vsyncadd [#allocation12], %s336
      %s338 = sshll.u32 [#allocation11], 4
      %s339 = int_to_ptr.vmem [resolvable:$true] %s338
      %344 = dma.vmem_to_hbm [thread:$0]  %s339, 128, %s8, [#allocation12], 64, 64, 4
    $region53: #{tpu_custom_call.1} parent=1 // pred_fallthru
      _
    // Predicated region
    $region54: #{tpu_custom_call.1} parent=1 // pred_check
      _
    $region55: #{tpu_custom_call.1} parent=1 // pred_check_branch
      %346 = sbr.rel (0) target = $region57
    $region56: #{tpu_custom_call.1} parent=1 // pred_region
      %s348 = ssub.s32 128, 128
      %349 = vsyncadd [#allocation12], %s348
      %s350 = sshll.u32 [#allocation13], 4
      %s351 = int_to_ptr.vmem [resolvable:$true] %s350
      %356 = dma.vmem_to_hbm [thread:$0]  %s351, 128, %s9, [#allocation12], 64, 64, 4
    $region57: #{tpu_custom_call.1} parent=1 // pred_fallthru
      _
    // Predicated region
    $region58: #{tpu_custom_call.1} parent=1 // pred_check
      _
    $region59: #{tpu_custom_call.1} parent=1 // pred_check_branch
      %358 = sbr.rel (0) target = $region61
    $region60: #{tpu_custom_call.1} parent=1 // pred_region
      %359 = dma.done [#allocation4], 128
    $region61: #{tpu_custom_call.1} parent=1 // pred_fallthru
      _
    // Predicated region
    $region62: #{tpu_custom_call.1} parent=1 // pred_check
      _
    $region63: #{tpu_custom_call.1} parent=1 // pred_check_branch
      %361 = sbr.rel (0) target = $region65
    $region64: #{tpu_custom_call.1} parent=1 // pred_region
      %362 = dma.done [#allocation12], 128
    $region65: #{tpu_custom_call.1} parent=1 // pred_fallthru
      _
    // Predicated region
    $region66: #{tpu_custom_call.1} parent=1 // pred_check
      _
    $region67: #{tpu_custom_call.1} parent=1 // pred_check_branch
      %364 = sbr.rel (0) target = $region69
    $region68: #{tpu_custom_call.1} parent=1 // pred_region
      %365 = dma.done [#allocation12], 128
    $region69: #{tpu_custom_call.1} parent=1 // pred_fallthru
      _
    %366 = vsyncpa [#allocation3], 1
    %367 = vsyncpa [#allocation6], 1
    %368 = vsyncpa [#allocation9], 1
    %369 = vsyncpa [#allocation4], 1
    %370 = vsyncpa [#allocation12], 1

</llo_original>
